<compile_context>
chip_gen: v5e
topology: v5e:2x2
jax: 0.10.0
libtpu: 0.0.40
codegen_flags: <defaults>
</compile_context>

<pallas_src>
import functools

import jax
import jax.numpy as jnp
from jax import lax
from jax.experimental import pallas as pl
from jax.experimental.pallas import tpu as pltpu
import numpy as np


def prepare_conv_block_params(w_oihw, gamma, beta, W):
    """Parameter-only preprocessing (hoist out of the hot path; reuse across calls).

    Builds the banded weight matrices B[kh] with
      B[kh][(w+kw-1)*Cin + ci, w*Cout + co] = W[co, ci, kh, kw]
    (out-of-range w+kw-1 entries stay 0 == zero padding along W), plus the packed
    per-channel BN vectors and the channel-reduce/rebroadcast matrix.
    """
    Cout, Cin, KH, KW = w_oihw.shape
    WCi, WCo = W * Cin, W * Cout

    w_hwio = jnp.transpose(w_oihw, (2, 3, 1, 0)).astype(jnp.float32)   # (3,3,Cin,Cout)
    bands = []
    for kh in range(KH):
        bk = jnp.zeros((WCi, WCo), jnp.float32)
        for kw in range(KW):
            shift = jnp.eye(W, k=1 - kw, dtype=jnp.float32)            # (W, W)
            bk = bk + jnp.kron(shift, w_hwio[kh, kw])                  # (W*Cin, W*Cout)
        bands.append(bk)
    bands = jnp.stack(bands, axis=0)                                    # (3, WCi, WCo)

    gamma_p = jnp.tile(gamma.astype(jnp.float32), W).reshape(1, WCo)
    beta_p = jnp.tile(beta.astype(jnp.float32), W).reshape(1, WCo)
    # R[w*Cout+c, w'*Cout+c'] = (c == c'): maps packed per-(w,c) sums to per-channel
    # totals replicated across all w positions (stats reduction + re-broadcast via MXU).
    chan_reduce = jnp.kron(jnp.ones((W, W), jnp.float32),
                           jnp.eye(Cout, dtype=jnp.float32))            # (WCo, WCo)
    return bands, gamma_p, beta_p, chan_reduce


@functools.partial(jax.jit, static_argnames=("eps", "negative_slope"))
def conv_block_forward(x_nchw, bands, gamma_p, beta_p, chan_reduce,
                       eps=1e-5, negative_slope=0.2):
    N, Cin, H, W = x_nchw.shape
    WCi = W * Cin
    WCo = bands.shape[-1]
    Cout = WCo // W
    Hp = H + 2
    M = N * Hp                       # stacked rows (incl. the 2 seam rows per batch)

    # NCHW -> lane-dense row slabs, H zero-padded, batches stacked along rows, plus two
    # trailing zero rows so the 3-row window of the last seam row stays in bounds.
    x_rows = jnp.transpose(x_nchw, (0, 2, 3, 1)).astype(jnp.float32).reshape(N, H, WCi)
    x_rows = jnp.pad(x_rows, ((0, 0), (1, 1), (0, 0))).reshape(M, WCi)
    x_rows = jnp.pad(x_rows, ((0, 2), (0, 0)))                          # (M + 2, WCi)

    # Valid-row mask: rows n*Hp + h with h < H are real conv outputs; the 2 seam rows
    # per batch straddle the zero-pad rows and must not contribute to the batch stats.
    valid = (jnp.arange(M) % Hp < H).astype(jnp.float32)
    mask = jnp.broadcast_to(valid[:, None], (M, WCo))                   # (M, WCo)

    inv_count = 1.0 / float(N * H * W)

    def kernel(x_ref, b_ref, mask_ref, gamma_ref, beta_ref, r_ref, o_ref):
        # ---- 3x3 conv: three lane-dense band matmuls over ALL batches at once -------
        acc = jnp.dot(x_ref[0:M, :], b_ref[0], preferred_element_type=jnp.float32)
        acc = acc + jnp.dot(x_ref[1:M + 1, :], b_ref[1],
                            preferred_element_type=jnp.float32)
        acc = acc + jnp.dot(x_ref[2:M + 2, :], b_ref[2],
                            preferred_element_type=jnp.float32)
        # (conv bias intentionally omitted: cancelled exactly by the BN mean subtract)

        # ---- BatchNorm (batch stats over valid rows only) + LeakyReLU, in VMEM ------
        m = mask_ref[...]
        col = jnp.sum(acc * m, axis=0, keepdims=True)                   # (1, WCo)
        mean_p = jnp.dot(col, r_ref[...],
                         preferred_element_type=jnp.float32) * inv_count
        d = (acc - mean_p) * m                                          # mean-centered
        sq = jnp.sum(d * d, axis=0, keepdims=True)
        var_p = jnp.dot(sq, r_ref[...],
                        preferred_element_type=jnp.float32) * inv_count
        scale_p = gamma_ref[...] * lax.rsqrt(var_p + eps)
        shift_p = beta_ref[...] - mean_p * scale_p
        z = acc * scale_p + shift_p
        o_ref[...] = jnp.where(z >= 0, z, negative_slope * z)

    vmem = pl.BlockSpec(memory_space=pltpu.MemorySpace.VMEM)            # whole array in VMEM
    out_packed = pl.pallas_call(
        kernel,
        out_shape=jax.ShapeDtypeStruct((M, WCo), jnp.float32),
        in_specs=[vmem] * 6,
        out_specs=vmem,
    )(x_rows, bands, mask, gamma_p, beta_p, chan_reduce)

    # Drop the 2 seam rows per batch and return NCHW to match the PyTorch interface.
    out = out_packed.reshape(N, Hp, W, Cout)[:, :H]
    return jnp.transpose(out, (0, 3, 1, 2))


# -------------------------- pure-JAX reference (correctness check) --------------------
def conv_block_reference(x, w, b, gamma, beta, eps=1e-5):
    y = lax.conv_general_dilated(
        x, w, window_strides=(1, 1), padding=((1, 1), (1, 1)),
        dimension_numbers=("NCHW", "OIHW", "NCHW"),
        precision=lax.Precision.HIGHEST)
    y = y + b[None, :, None, None]
    mean = y.mean(axis=(0, 2, 3))
    var = y.var(axis=(0, 2, 3))                      # biased, like PyTorch BN forward
    z = (y - mean[None, :, None, None]) / jnp.sqrt(var + eps)[None, :, None, None]
    z = z * gamma[None, :, None, None] + beta[None, :, None, None]
    return jnp.where(z >= 0, z, 0.2 * z)


if __name__ == "__main__":
    # ConvBlock(in_channels=4, out_channels=8) on input (2, 4, 16, 16)
    N, Cin, H, W = 2, 4, 16, 16
    Cout, K = 8, 3

    key = jax.random.PRNGKey(0)
    kx, kw, kb, kg, kbeta = jax.random.split(key, 5)

    x = jax.random.normal(kx, (N, Cin, H, W), dtype=jnp.float32)
    w = jax.random.normal(kw, (Cout, Cin, K, K), dtype=jnp.float32) * 0.1
    b = jax.random.normal(kb, (Cout,), dtype=jnp.float32) * 0.1   # cancelled by BN
    gamma = 1.0 + 0.1 * jax.random.normal(kg, (Cout,), dtype=jnp.float32)
    beta = 0.1 * jax.random.normal(kbeta, (Cout,), dtype=jnp.float32)

    bands, gamma_p, beta_p, chan_reduce = prepare_conv_block_params(w, gamma, beta, W)

    out = jax.block_until_ready(
        conv_block_forward(x, bands, gamma_p, beta_p, chan_reduce))
    ref = jax.block_until_ready(conv_block_reference(x, w, b, gamma, beta))

    assert out.shape == (N, Cout, H, W)
    np.testing.assert_allclose(np.asarray(out), np.asarray(ref), rtol=2e-3, atol=2e-3)

    print("KERNEL_OK")
</pallas_src>

<mosaic_0001>
module attributes {stable_mosaic.version = 11 : i64} {
  func.func @kernel(%arg0: memref<38x64xf32, #tpu.memory_space<vmem>>, %arg1: memref<3x64x128xf32, #tpu.memory_space<vmem>>, %arg2: memref<36x128xf32, #tpu.memory_space<vmem>>, %arg3: memref<1x128xf32, #tpu.memory_space<vmem>>, %arg4: memref<1x128xf32, #tpu.memory_space<vmem>>, %arg5: memref<128x128xf32, #tpu.memory_space<vmem>>, %arg6: memref<36x128xf32, #tpu.memory_space<vmem>>) attributes {dimension_semantics = [], scalar_prefetch = 0 : i64, scratch_operands = 0 : i64, tpu.core_type = #tpu.core_type<tc>} {
    %c0 = arith.constant 0 : index
    %c0_0 = arith.constant 0 : index
    %0 = vector.load %arg0[%c0, %c0_0] : memref<38x64xf32, #tpu.memory_space<vmem>>, vector<36x64xf32>
    %c0_1 = arith.constant 0 : index
    %c0_2 = arith.constant 0 : index
    %c0_3 = arith.constant 0 : index
    %1 = vector.load %arg1[%c0_1, %c0_2, %c0_3] : memref<3x64x128xf32, #tpu.memory_space<vmem>>, vector<1x64x128xf32>
    %2 = vector.shape_cast %1 : vector<1x64x128xf32> to vector<64x128xf32>
    %cst = arith.constant dense<0.000000e+00> : vector<36x128xf32>
    %3 = tpu.matmul %0, %2, %cst {dimension_numbers = #tpu.dot_dimension_numbers<[1], [0], [0], [1], [0, 0, 1, 1], [], []>} : vector<36x64xf32>, vector<64x128xf32>, vector<36x128xf32> -> vector<36x128xf32>
    %c1 = arith.constant 1 : index
    %c0_4 = arith.constant 0 : index
    %4 = vector.load %arg0[%c1, %c0_4] : memref<38x64xf32, #tpu.memory_space<vmem>>, vector<36x64xf32>
    %c1_5 = arith.constant 1 : index
    %c0_6 = arith.constant 0 : index
    %c0_7 = arith.constant 0 : index
    %5 = vector.load %arg1[%c1_5, %c0_6, %c0_7] : memref<3x64x128xf32, #tpu.memory_space<vmem>>, vector<1x64x128xf32>
    %6 = vector.shape_cast %5 : vector<1x64x128xf32> to vector<64x128xf32>
    %cst_8 = arith.constant dense<0.000000e+00> : vector<36x128xf32>
    %7 = tpu.matmul %4, %6, %cst_8 {dimension_numbers = #tpu.dot_dimension_numbers<[1], [0], [0], [1], [0, 0, 1, 1], [], []>} : vector<36x64xf32>, vector<64x128xf32>, vector<36x128xf32> -> vector<36x128xf32>
    %8 = arith.addf %3, %7 : vector<36x128xf32>
    %c2 = arith.constant 2 : index
    %c0_9 = arith.constant 0 : index
    %9 = vector.load %arg0[%c2, %c0_9] : memref<38x64xf32, #tpu.memory_space<vmem>>, vector<36x64xf32>
    %c2_10 = arith.constant 2 : index
    %c0_11 = arith.constant 0 : index
    %c0_12 = arith.constant 0 : index
    %10 = vector.load %arg1[%c2_10, %c0_11, %c0_12] : memref<3x64x128xf32, #tpu.memory_space<vmem>>, vector<1x64x128xf32>
    %11 = vector.shape_cast %10 : vector<1x64x128xf32> to vector<64x128xf32>
    %cst_13 = arith.constant dense<0.000000e+00> : vector<36x128xf32>
    %12 = tpu.matmul %9, %11, %cst_13 {dimension_numbers = #tpu.dot_dimension_numbers<[1], [0], [0], [1], [0, 0, 1, 1], [], []>} : vector<36x64xf32>, vector<64x128xf32>, vector<36x128xf32> -> vector<36x128xf32>
    %13 = arith.addf %8, %12 : vector<36x128xf32>
    %c0_14 = arith.constant 0 : index
    %c0_15 = arith.constant 0 : index
    %14 = vector.load %arg2[%c0_14, %c0_15] : memref<36x128xf32, #tpu.memory_space<vmem>>, vector<36x128xf32>
    %15 = arith.mulf %13, %14 : vector<36x128xf32>
    %cst_16 = arith.constant dense<0.000000e+00> : vector<128xf32>
    %16 = vector.multi_reduction <add>, %15, %cst_16 [0] : vector<36x128xf32> to vector<128xf32>
    %17 = vector.shape_cast %16 : vector<128xf32> to vector<1x128xf32>
    %c0_17 = arith.constant 0 : index
    %c0_18 = arith.constant 0 : index
    %18 = vector.load %arg5[%c0_17, %c0_18] : memref<128x128xf32, #tpu.memory_space<vmem>>, vector<128x128xf32>
    %cst_19 = arith.constant dense<0.000000e+00> : vector<1x128xf32>
    %19 = tpu.matmul %17, %18, %cst_19 {dimension_numbers = #tpu.dot_dimension_numbers<[1], [0], [0], [1], [0, 0, 1, 1], [], []>} : vector<1x128xf32>, vector<128x128xf32>, vector<1x128xf32> -> vector<1x128xf32>
    %cst_20 = arith.constant 0.001953125 : f32
    %20 = vector.broadcast %cst_20 : f32 to vector<1x128xf32>
    %21 = arith.mulf %19, %20 : vector<1x128xf32>
    %22 = vector.broadcast %21 : vector<1x128xf32> to vector<36x128xf32>
    %23 = arith.subf %13, %22 : vector<36x128xf32>
    %24 = arith.mulf %23, %14 : vector<36x128xf32>
    %25 = arith.mulf %24, %24 : vector<36x128xf32>
    %cst_21 = arith.constant dense<0.000000e+00> : vector<128xf32>
    %26 = vector.multi_reduction <add>, %25, %cst_21 [0] : vector<36x128xf32> to vector<128xf32>
    %27 = vector.shape_cast %26 : vector<128xf32> to vector<1x128xf32>
    %c0_22 = arith.constant 0 : index
    %c0_23 = arith.constant 0 : index
    %28 = vector.load %arg5[%c0_22, %c0_23] : memref<128x128xf32, #tpu.memory_space<vmem>>, vector<128x128xf32>
    %cst_24 = arith.constant dense<0.000000e+00> : vector<1x128xf32>
    %29 = tpu.matmul %27, %28, %cst_24 {dimension_numbers = #tpu.dot_dimension_numbers<[1], [0], [0], [1], [0, 0, 1, 1], [], []>} : vector<1x128xf32>, vector<128x128xf32>, vector<1x128xf32> -> vector<1x128xf32>
    %cst_25 = arith.constant 0.001953125 : f32
    %30 = vector.broadcast %cst_25 : f32 to vector<1x128xf32>
    %31 = arith.mulf %29, %30 : vector<1x128xf32>
    %c0_26 = arith.constant 0 : index
    %c0_27 = arith.constant 0 : index
    %32 = vector.load %arg3[%c0_26, %c0_27] : memref<1x128xf32, #tpu.memory_space<vmem>>, vector<1x128xf32>
    %cst_28 = arith.constant 9.99999974E-6 : f32
    %33 = vector.broadcast %cst_28 : f32 to vector<1x128xf32>
    %34 = arith.addf %31, %33 : vector<1x128xf32>
    %35 = math.rsqrt %34 : vector<1x128xf32>
    %36 = arith.mulf %32, %35 : vector<1x128xf32>
    %c0_29 = arith.constant 0 : index
    %c0_30 = arith.constant 0 : index
    %37 = vector.load %arg4[%c0_29, %c0_30] : memref<1x128xf32, #tpu.memory_space<vmem>>, vector<1x128xf32>
    %38 = arith.mulf %21, %36 : vector<1x128xf32>
    %39 = arith.subf %37, %38 : vector<1x128xf32>
    %40 = vector.broadcast %36 : vector<1x128xf32> to vector<36x128xf32>
    %41 = arith.mulf %13, %40 : vector<36x128xf32>
    %42 = vector.broadcast %39 : vector<1x128xf32> to vector<36x128xf32>
    %43 = arith.addf %41, %42 : vector<36x128xf32>
    %cst_31 = arith.constant 0.000000e+00 : f32
    %44 = vector.broadcast %cst_31 : f32 to vector<36x128xf32>
    %45 = arith.cmpf oge, %43, %44 : vector<36x128xf32>
    %cst_32 = arith.constant 2.000000e-01 : f32
    %46 = vector.broadcast %cst_32 : f32 to vector<36x128xf32>
    %47 = arith.mulf %46, %43 : vector<36x128xf32>
    %48 = arith.select %45, %43, %47 : vector<36x128xi1>, vector<36x128xf32>
    %c0_33 = arith.constant 0 : index
    %c0_34 = arith.constant 0 : index
    %49 = vector.load %arg6[%c0_33, %c0_34] : memref<36x128xf32, #tpu.memory_space<vmem>>, vector<36x128xf32>
    tpu.vector_store %arg6[%c0_33, %c0_34], %48 {strides = array<i32>} : memref<36x128xf32, #tpu.memory_space<vmem>>, vector<36x128xf32>,
    return
  }
}

</mosaic_0001>

<llo_original>
// kernel: conv_block_forward.1
$region0: #{conv_block_forward.1}
  #allocation0 [shape = 'u32[]', space=smem, size = 0x4, offset = 0x4, fixed_abs, tag = 'smem constant byte address 0x4 - core index']
  #allocation1 [shape = 'u32[72,128]{1,0:T(1,128)}', space=vmem, size = 0x9000, scoped, tag = 'internal scratch']
  %s0 = inlined_call_operand.vmem [shape: f32[38,64], index: 0, kind: input, shape index: {}]
  %s1 = inlined_call_operand.vmem [shape: f32[3,64,128], index: 1, kind: input, shape index: {}]
  %s2 = inlined_call_operand.vmem [shape: f32[36,128], index: 2, kind: input, shape index: {}]
  %s3 = inlined_call_operand.vmem [shape: f32[1,128], index: 3, kind: input, shape index: {}]
  %s4 = inlined_call_operand.vmem [shape: f32[1,128], index: 4, kind: input, shape index: {}]
  %s5 = inlined_call_operand.vmem [shape: f32[128,128], index: 5, kind: input, shape index: {}]
  %s6 = inlined_call_operand.vmem [shape: f32[36,128], index: 6, kind: output, shape index: {}]
  %s7 = sld [smem:[#allocation0]]
  $region34: #{conv_block_forward.1} parent=0
    _
  %s9 = ssub.s32 1, %s7
  %s10 = scalar_select 0, %s9, %s7
  // Predicated region
  $region2: #{conv_block_forward.1} parent=0 // pred_check
    _
  $region3: #{conv_block_forward.1} parent=0 // pred_check_branch
    %12 = sbr.rel (0) target = $region5
  $region4: #{conv_block_forward.1} parent=0 // pred_region
    _
  $region5: #{conv_block_forward.1} parent=0 // pred_fallthru
    _
  // Predicated region
  $region6: #{conv_block_forward.1} parent=0 // pred_check
    _
  $region7: #{conv_block_forward.1} parent=0 // pred_check_branch
    %14 = sbr.rel (0) target = $region9
  $region8: #{conv_block_forward.1} parent=0 // pred_region
    _
  $region9: #{conv_block_forward.1} parent=0 // pred_fallthru
    _
  // Predicated region
  $region10: #{conv_block_forward.1} parent=0 // pred_check
    _
  $region11: #{conv_block_forward.1} parent=0 // pred_check_branch
    %16 = sbr.rel (0) target = $region13
  $region12: #{conv_block_forward.1} parent=0 // pred_region
    _
  $region13: #{conv_block_forward.1} parent=0 // pred_fallthru
    _
  // Predicated region
  $region14: #{conv_block_forward.1} parent=0 // pred_check
    _
  $region15: #{conv_block_forward.1} parent=0 // pred_check_branch
    %18 = sbr.rel (0) target = $region17
  $region16: #{conv_block_forward.1} parent=0 // pred_region
    _
  $region17: #{conv_block_forward.1} parent=0 // pred_fallthru
    _
  // Predicated region
  $region18: #{conv_block_forward.1} parent=0 // pred_check
    _
  $region19: #{conv_block_forward.1} parent=0 // pred_check_branch
    %20 = sbr.rel (0) target = $region21
  $region20: #{conv_block_forward.1} parent=0 // pred_region
    _
  $region21: #{conv_block_forward.1} parent=0 // pred_fallthru
    _
  // Predicated region
  $region22: #{conv_block_forward.1} parent=0 // pred_check
    _
  $region23: #{conv_block_forward.1} parent=0 // pred_check_branch
    %22 = sbr.rel (0) target = $region25
  $region24: #{conv_block_forward.1} parent=0 // pred_region
    _
  $region25: #{conv_block_forward.1} parent=0 // pred_fallthru
    _
  %v23 = vld [vmem:[%s0] sm:$0xff]
  %v24 = vld [vmem:[%s0 + $0x8] sm:$0xff]
  %v25 = vld [vmem:[%s0 + $0x10] sm:$0xff]
  %v26 = vld [vmem:[%s0 + $0x18] sm:$0xff]
  %v27 = vld [vmem:[%s0 + $0x20] sm:$0xf]
  %v28 = vld [vmem:[%s1] sm:$0xff]
  %v29 = vld [vmem:[%s1 + $0x8] sm:$0xff]
  %v30 = vld [vmem:[%s1 + $0x10] sm:$0xff]
  %v31 = vld [vmem:[%s1 + $0x18] sm:$0xff]
  %v32 = vld [vmem:[%s1 + $0x20] sm:$0xff]
  %v33 = vld [vmem:[%s1 + $0x28] sm:$0xff]
  %v34 = vld [vmem:[%s1 + $0x30] sm:$0xff]
  %v35 = vld [vmem:[%s1 + $0x38] sm:$0xff]
  %v36 = vld [vmem:[%s0 + $0x1] sm:$0xff]
  %v37 = vld [vmem:[%s0 + $0x9] sm:$0xff]
  %v38 = vld [vmem:[%s0 + $0x11] sm:$0xff]
  %v39 = vld [vmem:[%s0 + $0x19] sm:$0xff]
  %v40 = vld [vmem:[%s0 + $0x21] sm:$0xf]
  %s41 = scalar_lea.vmem %s1, 64
  %v42 = vld [vmem:[%s41] sm:$0xff]
  %v43 = vld [vmem:[%s41 + $0x8] sm:$0xff]
  %v44 = vld [vmem:[%s41 + $0x10] sm:$0xff]
  %v45 = vld [vmem:[%s41 + $0x18] sm:$0xff]
  %v46 = vld [vmem:[%s41 + $0x20] sm:$0xff]
  %v47 = vld [vmem:[%s41 + $0x28] sm:$0xff]
  %v48 = vld [vmem:[%s41 + $0x30] sm:$0xff]
  %v49 = vld [vmem:[%s41 + $0x38] sm:$0xff]
  %vm50 = vcmask 523264
  %v52 = vsel %vm50, %v36, 0
  %v55 = vsel %vm50, %v37, 0
  %v58 = vsel %vm50, %v38, 0
  %v61 = vsel %vm50, %v39, 0
  %v64 = vsel %vm50, %v40, 0
  %66 = vmatpush.msra.mxu0 0.0
  %67 = vmatpush.msra.mxu0 0.0
  %68 = vmatpush.msra.mxu0 0.0
  %69 = vmatpush.msra.mxu0 0.0
  %70 = vmatpush.msra.mxu0 0.0
  %71 = vmatpush.msra.mxu0 0.0
  %72 = vmatpush.msra.mxu0 0.0
  %73 = vmatpush.msra.mxu0 0.0
  %74 = vmatpush.msra.mxu0 %v49
  %75 = vmatpush.msra.mxu0 %v48
  %76 = vmatpush.msra.mxu0 %v47
  %77 = vmatpush.msra.mxu0 %v46
  %78 = vmatpush.msra.mxu0 %v45
  %79 = vmatpush.msra.mxu0 %v44
  %80 = vmatpush.msra.mxu0 %v43
  %81 = vmatpush.msra.mxu0 %v42
  %82 = vmatmul.f32.gmra.mxu0 %v52
  %v83 = vpop.f32.mrf.mxu0
  %v84 = vadd.f32 0.0, %v83
  %85 = vmatmul.f32.gmra.mxu0 %v55
  %v86 = vpop.f32.mrf.mxu0
  %v87 = vadd.f32 0.0, %v86
  %88 = vmatmul.f32.gmra.mxu0 %v58
  %v89 = vpop.f32.mrf.mxu0
  %v90 = vadd.f32 0.0, %v89
  %91 = vmatmul.f32.gmra.mxu0 %v61
  %v92 = vpop.f32.mrf.mxu0
  %v93 = vadd.f32 0.0, %v92
  %94 = vmatmul.f32.gmra.mxu0 %v64
  %v95 = vpop.f32.mrf.mxu0
  %v96 = vadd.f32 0.0, %v95
  %97 = vdwg.mxu0
  %v99 = vsel %vm50, %v23, 0
  %v102 = vsel %vm50, %v24, 0
  %v105 = vsel %vm50, %v25, 0
  %v108 = vsel %vm50, %v26, 0
  %v111 = vsel %vm50, %v27, 0
  %113 = vmatpush.msra.mxu0 0.0
  %114 = vmatpush.msra.mxu0 0.0
  %115 = vmatpush.msra.mxu0 0.0
  %116 = vmatpush.msra.mxu0 0.0
  %117 = vmatpush.msra.mxu0 0.0
  %118 = vmatpush.msra.mxu0 0.0
  %119 = vmatpush.msra.mxu0 0.0
  %120 = vmatpush.msra.mxu0 0.0
  %121 = vmatpush.msra.mxu0 %v35
  %122 = vmatpush.msra.mxu0 %v34
  %123 = vmatpush.msra.mxu0 %v33
  %124 = vmatpush.msra.mxu0 %v32
  %125 = vmatpush.msra.mxu0 %v31
  %126 = vmatpush.msra.mxu0 %v30
  %127 = vmatpush.msra.mxu0 %v29
  %128 = vmatpush.msra.mxu0 %v28
  %129 = vmatmul.f32.gmra.mxu0 %v99
  %v130 = vpop.f32.mrf.mxu0
  %v131 = vadd.f32 %v84, %v130
  %132 = vmatmul.f32.gmra.mxu0 %v102
  %v133 = vpop.f32.mrf.mxu0
  %v134 = vadd.f32 %v87, %v133
  %135 = vmatmul.f32.gmra.mxu0 %v105
  %v136 = vpop.f32.mrf.mxu0
  %v137 = vadd.f32 %v90, %v136
  %138 = vmatmul.f32.gmra.mxu0 %v108
  %v139 = vpop.f32.mrf.mxu0
  %v140 = vadd.f32 %v93, %v139
  %141 = vmatmul.f32.gmra.mxu0 %v111
  %v142 = vpop.f32.mrf.mxu0
  %v143 = vadd.f32 %v96, %v142
  %144 = vdwg.mxu0
  %v145 = vld [vmem:[%s0 + $0x2] sm:$0xff]
  %v146 = vld [vmem:[%s0 + $0xa] sm:$0xff]
  %v147 = vld [vmem:[%s0 + $0x12] sm:$0xff]
  %v148 = vld [vmem:[%s0 + $0x1a] sm:$0xff]
  %v149 = vld [vmem:[%s0 + $0x22] sm:$0xf]
  %s150 = scalar_lea.vmem %s1, 128
  %v151 = vld [vmem:[%s150] sm:$0xff]
  %v152 = vld [vmem:[%s150 + $0x8] sm:$0xff]
  %v153 = vld [vmem:[%s150 + $0x10] sm:$0xff]
  %v154 = vld [vmem:[%s150 + $0x18] sm:$0xff]
  %v155 = vld [vmem:[%s150 + $0x20] sm:$0xff]
  %v156 = vld [vmem:[%s150 + $0x28] sm:$0xff]
  %v157 = vld [vmem:[%s150 + $0x30] sm:$0xff]
  %v158 = vld [vmem:[%s150 + $0x38] sm:$0xff]
  %v160 = vsel %vm50, %v145, 0
  %v163 = vsel %vm50, %v146, 0
  %v166 = vsel %vm50, %v147, 0
  %v169 = vsel %vm50, %v148, 0
  %v172 = vsel %vm50, %v149, 0
  %174 = vmatpush.msra.mxu0 0.0
  %175 = vmatpush.msra.mxu0 0.0
  %176 = vmatpush.msra.mxu0 0.0
  %177 = vmatpush.msra.mxu0 0.0
  %178 = vmatpush.msra.mxu0 0.0
  %179 = vmatpush.msra.mxu0 0.0
  %180 = vmatpush.msra.mxu0 0.0
  %181 = vmatpush.msra.mxu0 0.0
  %182 = vmatpush.msra.mxu0 %v158
  %183 = vmatpush.msra.mxu0 %v157
  %184 = vmatpush.msra.mxu0 %v156
  %185 = vmatpush.msra.mxu0 %v155
  %186 = vmatpush.msra.mxu0 %v154
  %187 = vmatpush.msra.mxu0 %v153
  %188 = vmatpush.msra.mxu0 %v152
  %189 = vmatpush.msra.mxu0 %v151
  %190 = vmatmul.f32.gmra.mxu0 %v160
  %v191 = vpop.f32.mrf.mxu0
  %v192 = vadd.f32 0.0, %v191
  %193 = vmatmul.f32.gmra.mxu0 %v163
  %v194 = vpop.f32.mrf.mxu0
  %v195 = vadd.f32 0.0, %v194
  %196 = vmatmul.f32.gmra.mxu0 %v166
  %v197 = vpop.f32.mrf.mxu0
  %v198 = vadd.f32 0.0, %v197
  %199 = vmatmul.f32.gmra.mxu0 %v169
  %v200 = vpop.f32.mrf.mxu0
  %v201 = vadd.f32 0.0, %v200
  %202 = vmatmul.f32.gmra.mxu0 %v172
  %v203 = vpop.f32.mrf.mxu0
  %v204 = vadd.f32 0.0, %v203
  %205 = vdwg.mxu0
  %v206 = vadd.f32 %v131, %v192
  %v207 = vadd.f32 %v134, %v195
  %v208 = vadd.f32 %v137, %v198
  %v209 = vadd.f32 %v140, %v201
  %v210 = vadd.f32 %v143, %v204
  %v211 = vld [vmem:[%s2] sm:$0xff]
  %v212 = vld [vmem:[%s2 + $0x8] sm:$0xff]
  %v213 = vld [vmem:[%s2 + $0x10] sm:$0xff]
  %v214 = vld [vmem:[%s2 + $0x18] sm:$0xff]
  %v215 = vld [vmem:[%s2 + $0x20] sm:$0xf]
  %v216 = vmul.f32 %v206, %v211
  %v217 = vmul.f32 %v207, %v212
  %v218 = vmul.f32 %v208, %v213
  %v219 = vmul.f32 %v209, %v214
  %v220 = vmul.f32 %v210, %v215
  %v221 = vadd.f32 %v216, %v217
  %v222 = vadd.f32 %v221, %v218
  %v223 = vadd.f32 %v222, %v219
  %vm224 = vcmask 1043456
  %v225 = vsel %vm224, %v220, 0.0
  %v226 = vadd.f32 %v223, %v225
  %v227 = vrot.slane %v226, 4
  %v228 = vadd.f32 %v226, %v227
  %v229 = vrot.slane %v228, 2
  %v230 = vadd.f32 %v228, %v229
  %v231 = vrot.slane %v230, 1
  %v232 = vadd.f32 %v230, %v231
  %v233 = vld [vmem:[%s5] sm:$0xff]
  %v234 = vld [vmem:[%s5 + $0x8] sm:$0xff]
  %v235 = vld [vmem:[%s5 + $0x10] sm:$0xff]
  %v236 = vld [vmem:[%s5 + $0x18] sm:$0xff]
  %v237 = vld [vmem:[%s5 + $0x20] sm:$0xff]
  %v238 = vld [vmem:[%s5 + $0x28] sm:$0xff]
  %v239 = vld [vmem:[%s5 + $0x30] sm:$0xff]
  %v240 = vld [vmem:[%s5 + $0x38] sm:$0xff]
  %v241 = vld [vmem:[%s5 + $0x40] sm:$0xff]
  %v242 = vld [vmem:[%s5 + $0x48] sm:$0xff]
  %v243 = vld [vmem:[%s5 + $0x50] sm:$0xff]
  %v244 = vld [vmem:[%s5 + $0x58] sm:$0xff]
  %v245 = vld [vmem:[%s5 + $0x60] sm:$0xff]
  %v246 = vld [vmem:[%s5 + $0x68] sm:$0xff]
  %v247 = vld [vmem:[%s5 + $0x70] sm:$0xff]
  %v248 = vld [vmem:[%s5 + $0x78] sm:$0xff]
  %249 = vmatpush.msra.mxu0 %v248
  %250 = vmatpush.msra.mxu0 %v247
  %251 = vmatpush.msra.mxu0 %v246
  %252 = vmatpush.msra.mxu0 %v245
  %253 = vmatpush.msra.mxu0 %v244
  %254 = vmatpush.msra.mxu0 %v243
  %255 = vmatpush.msra.mxu0 %v242
  %256 = vmatpush.msra.mxu0 %v241
  %257 = vmatpush.msra.mxu0 %v240
  %258 = vmatpush.msra.mxu0 %v239
  %259 = vmatpush.msra.mxu0 %v238
  %260 = vmatpush.msra.mxu0 %v237
  %261 = vmatpush.msra.mxu0 %v236
  %262 = vmatpush.msra.mxu0 %v235
  %263 = vmatpush.msra.mxu0 %v234
  %264 = vmatpush.msra.mxu0 %v233
  %265 = vmatmul.f32.gmra.mxu0 %v232
  %v266 = vpop.f32.mrf.mxu0
  %v267 = vadd.f32 0.0, %v266
  %268 = vdwg.mxu0
  %v269 = vmul.f32 %v267, 0.001953125
  %v270 = vperm.slane %v269, 0
  %v271 = vsub.f32 %v206, %v270
  %v272 = vsub.f32 %v207, %v270
  %v273 = vsub.f32 %v208, %v270
  %v274 = vsub.f32 %v209, %v270
  %v275 = vsub.f32 %v210, %v270
  %v276 = vmul.f32 %v271, %v211
  %v277 = vmul.f32 %v272, %v212
  %v278 = vmul.f32 %v273, %v213
  %v279 = vmul.f32 %v274, %v214
  %v280 = vmul.f32 %v275, %v215
  %v281 = vmul.f32 %v276, %v276
  %v282 = vmul.f32 %v277, %v277
  %v283 = vmul.f32 %v278, %v278
  %v284 = vmul.f32 %v279, %v279
  %v285 = vmul.f32 %v280, %v280
  %v286 = vadd.f32 %v281, %v282
  %v287 = vadd.f32 %v286, %v283
  %v288 = vadd.f32 %v287, %v284
  %v289 = vsel %vm224, %v285, 0.0
  %v290 = vadd.f32 %v288, %v289
  %v291 = vrot.slane %v290, 4
  %v292 = vadd.f32 %v290, %v291
  %v293 = vrot.slane %v292, 2
  %v294 = vadd.f32 %v292, %v293
  %v295 = vrot.slane %v294, 1
  %v296 = vadd.f32 %v294, %v295
  %297 = vmatpush.msra.mxu0 %v248
  %298 = vmatpush.msra.mxu0 %v247
  %299 = vmatpush.msra.mxu0 %v246
  %300 = vmatpush.msra.mxu0 %v245
  %301 = vmatpush.msra.mxu0 %v244
  %302 = vmatpush.msra.mxu0 %v243
  %303 = vmatpush.msra.mxu0 %v242
  %304 = vmatpush.msra.mxu0 %v241
  %305 = vmatpush.msra.mxu0 %v240
  %306 = vmatpush.msra.mxu0 %v239
  %307 = vmatpush.msra.mxu0 %v238
  %308 = vmatpush.msra.mxu0 %v237
  %309 = vmatpush.msra.mxu0 %v236
  %310 = vmatpush.msra.mxu0 %v235
  %311 = vmatpush.msra.mxu0 %v234
  %312 = vmatpush.msra.mxu0 %v233
  %313 = vmatmul.f32.gmra.mxu0 %v296
  %v314 = vpop.f32.mrf.mxu0
  %v315 = vadd.f32 0.0, %v314
  %316 = vdwg.mxu0
  %v317 = vmul.f32 %v315, 0.001953125
  %v318 = vld [vmem:[%s3] sm:$0x1]
  %v319 = vadd.f32 %v317, 1e-05
  %v320 = vrsqrt.pop %v319
  %v321 = vmul.f32 %v320, %v319
  %v322 = vmul.f32 %v321, %v320
  %v323 = vmul.f32 0.5, %v322
  %v324 = vsub.f32 1.5, %v323
  %v325 = vmul.f32 %v320, %v324
  %vm326 = vweird.f32 %v319
  %vm327 = vweird.f32 %v320
  %vm328 = vmor %vm326, %vm327
  %v329 = vsel %vm328, %v320, %v325
  %v330 = vmul.f32 %v318, %v329
  %v331 = vld [vmem:[%s4] sm:$0x1]
  %v332 = vmul.f32 %v269, %v330
  %v333 = vsub.f32 %v331, %v332
  %v335 = vperm.slane %v330, 0
  %v337 = vmul.f32 %v206, %v335
  %v338 = vmul.f32 %v207, %v335
  %v339 = vmul.f32 %v208, %v335
  %v340 = vmul.f32 %v209, %v335
  %v341 = vmul.f32 %v210, %v335
  %v343 = vperm.slane %v333, 0
  %v345 = vadd.f32 %v337, %v343
  %v346 = vadd.f32 %v338, %v343
  %v347 = vadd.f32 %v339, %v343
  %v348 = vadd.f32 %v340, %v343
  %v349 = vadd.f32 %v341, %v343
  %vm350 = vcmp.ge.f32.partialorder %v345, 0.0
  %vm351 = vcmp.ge.f32.partialorder %v346, 0.0
  %vm352 = vcmp.ge.f32.partialorder %v347, 0.0
  %vm353 = vcmp.ge.f32.partialorder %v348, 0.0
  %vm354 = vcmp.ge.f32.partialorder %v349, 0.0
  %v355 = vmul.f32 %v345, 0.2
  %v356 = vmul.f32 %v346, 0.2
  %v357 = vmul.f32 %v347, 0.2
  %v358 = vmul.f32 %v348, 0.2
  %v359 = vmul.f32 %v349, 0.2
  %v360 = vsel %vm350, %v345, %v355
  %v361 = vsel %vm351, %v346, %v356
  %v362 = vsel %vm352, %v347, %v357
  %v363 = vsel %vm353, %v348, %v358
  %v364 = vsel %vm354, %v349, %v359
  %365 = vst [vmem:[%s6] sm:$0xff] %v360
  %366 = vst [vmem:[%s6 + $0x8] sm:$0xff] %v361
  %367 = vst [vmem:[%s6 + $0x10] sm:$0xff] %v362
  %368 = vst [vmem:[%s6 + $0x18] sm:$0xff] %v363
  %369 = vst [vmem:[%s6 + $0x20] sm:$0xf] %v364
  // Predicated region
  $region26: #{conv_block_forward.1} parent=0 // pred_check
    _
  $region27: #{conv_block_forward.1} parent=0 // pred_check_branch
    %371 = sbr.rel (0) target = $region29
  $region28: #{conv_block_forward.1} parent=0 // pred_region
    _
  $region29: #{conv_block_forward.1} parent=0 // pred_fallthru
    _
  // Predicated region
  $region30: #{conv_block_forward.1} parent=0 // pred_check
    _
  $region31: #{conv_block_forward.1} parent=0 // pred_check_branch
    %373 = sbr.rel (0) target = $region33
  $region32: #{conv_block_forward.1} parent=0 // pred_region
    _
  $region33: #{conv_block_forward.1} parent=0 // pred_fallthru
    _

</llo_original>
